<compile_context>
chip_gen: v5e
topology: v5e:2x2
jax: 0.10.0
libtpu: 0.0.40
codegen_flags: <defaults>
</compile_context>

<pallas_src>
import functools

import jax
import jax.numpy as jnp
import numpy as np
from jax.experimental import pallas as pl
from jax.experimental.pallas import tpu as pltpu

KSIZES = (1, 2, 3, 4)
KMAX = 4


def _convblock_kernel(L, H, offsets, x_ref, wp_ref, bp_ref, o_ref, acc_ref):
    """One batch element per grid step.

    x_ref  : (1, L, D)          input block
    wp_ref : (KMAX, D, KMAX*H)  packed conv weights (taps zero-padded to KMAX)
    bp_ref : (1, KMAX*H)        packed biases
    o_ref  : (1, total_P, H)    concatenated pooled output
    acc_ref: (L, KMAX*H) f32    VMEM scratch (fused conv slab / SiLU slab)
    """
    KH = KMAX * H

    # ---- fused conv: accumulate the 4 taps into one (L, 4H) slab -----------
    # Tap 0 covers every row; tap t>0 only rows [0, L-t). The skipped tail
    # rows correspond to zero padding and are never read by a valid pool
    # window of the conv widths that use that tap.
    acc_ref[...] = jnp.dot(x_ref[0, 0:L, :], wp_ref[0],
                           preferred_element_type=jnp.float32)
    for t in range(1, KMAX):
        contrib = jnp.dot(x_ref[0, t:L, :], wp_ref[t],
                          preferred_element_type=jnp.float32)
        acc_ref[0:L - t, :] = acc_ref[0:L - t, :] + contrib

    # ---- bias + SiLU, once, in f32 ------------------------------------------
    y = acc_ref[...] + bp_ref[...]          # (L, 4H) + (1, 4H) broadcast
    acc_ref[...] = y * jax.nn.sigmoid(y)    # SiLU

    # ---- MaxPool1d(kernel=3, stride=3): same window rows for all four convs,
    #      only the number of valid windows Pk differs per k. -----------------
    Pmax = L // 3
    y0 = acc_ref[pl.ds(0, Pmax, stride=3), :]
    y1 = acc_ref[pl.ds(1, Pmax, stride=3), :]
    y2 = acc_ref[pl.ds(2, Pmax, stride=3), :]
    yp = jnp.maximum(jnp.maximum(y0, y1), y2)      # (Pmax, 4H)

    # ---- scatter each conv's pooled rows into the concatenated output -------
    for ki, k in enumerate(KSIZES):
        Pk = (L - k + 1) // 3
        if Pk > 0:
            o_ref[0, offsets[ki]:offsets[ki] + Pk, :] = (
                yp[:Pk, ki * H:(ki + 1) * H])


def conv_block_forward(x, weights, biases):
    """x: (B, L, D) f32; weights[i]: (k_i, D, H); biases[i]: (1, H)."""
    B, L, D = x.shape
    H = weights[0].shape[2]
    KH = KMAX * H

    # Pack the four conv weights/biases into single tensors (taps zero-padded).
    wp = jnp.zeros((KMAX, D, KH), jnp.float32)
    bp = jnp.zeros((1, KH), jnp.float32)
    for ki, (k, w, b) in enumerate(zip(KSIZES, weights, biases)):
        wp = wp.at[:k, :, ki * H:(ki + 1) * H].set(w)
        bp = bp.at[:, ki * H:(ki + 1) * H].set(b)

    Ps = [(L - k + 1) // 3 for k in KSIZES]
    offsets, acc = [], 0
    for p in Ps:
        offsets.append(acc)
        acc += p
    total_P = acc

    kernel = functools.partial(_convblock_kernel, L, H, tuple(offsets))
    out = pl.pallas_call(
        kernel,
        out_shape=jax.ShapeDtypeStruct((B, total_P, H), jnp.float32),
        grid=(B,),
        in_specs=[
            pl.BlockSpec((1, L, D), lambda b: (b, 0, 0)),
            pl.BlockSpec((KMAX, D, KH), lambda b: (0, 0, 0)),
            pl.BlockSpec((1, KH), lambda b: (0, 0)),
        ],
        out_specs=pl.BlockSpec((1, total_P, H), lambda b: (b, 0, 0)),
        scratch_shapes=[pltpu.VMEM((L, KH), jnp.float32)],
        compiler_params=pltpu.CompilerParams(
            dimension_semantics=("parallel",)),
    )(x, wp, bp)
    return out


def conv_block_reference(x, weights, biases):
    """Pure-JAX reference with identical math (sanity check)."""
    B, L, D = x.shape
    outs = []
    for k, w, bias in zip(KSIZES, weights, biases):
        Lk = L - k + 1
        H = w.shape[2]
        acc = jnp.zeros((B, Lk, H), jnp.float32)
        for t in range(k):
            acc = acc + jnp.einsum('bld,dh->blh', x[:, t:t + Lk, :], w[t])
        acc = acc + bias[None, :, :]
        y = jax.nn.silu(acc)
        Pk = Lk // 3
        y = y[:, :3 * Pk, :].reshape(B, Pk, 3, H).max(axis=2)
        outs.append(y)
    return jnp.concatenate(outs, axis=1)


if __name__ == "__main__":
    B, L, D, H = 2, 18, 8, 16   # batch, seq len, d_model, hidden_size

    key = jax.random.PRNGKey(0)
    keys = jax.random.split(key, 1 + len(KSIZES))
    x = jax.random.normal(keys[0], (B, L, D), jnp.float32)

    weights, biases = [], []
    for i, k in enumerate(KSIZES):
        # torch: nn.Conv1d(D, H, k) weight shape (H, D, k), xavier_normal_,
        # bias initialized to 0 (nn.init.constant_).
        fan_in, fan_out = D * k, H * k
        std = (2.0 / (fan_in + fan_out)) ** 0.5
        w_torch_layout = std * jax.random.normal(keys[i + 1], (H, D, k),
                                                 jnp.float32)
        weights.append(jnp.transpose(w_torch_layout, (2, 1, 0)))  # (k, D, H)
        biases.append(jnp.zeros((1, H), jnp.float32))

    out = conv_block_forward(x, weights, biases)
    out = jax.block_until_ready(out)

    ref = jax.block_until_ready(conv_block_reference(x, weights, biases))
    expected_len = sum((L - k + 1) // 3 for k in KSIZES)
    assert out.shape == (B, expected_len, H), out.shape
    assert np.allclose(np.asarray(out), np.asarray(ref), atol=1e-5, rtol=1e-5)

    print("KERNEL_OK")
</pallas_src>

<mosaic_0001>
module attributes {stable_mosaic.version = 11 : i64} {
  func.func @_convblock_kernel(%arg0: i32, %arg1: memref<1x18x8xf32, #tpu.memory_space<vmem>>, %arg2: memref<4x8x64xf32, #tpu.memory_space<vmem>>, %arg3: memref<1x64xf32, #tpu.memory_space<vmem>>, %arg4: memref<1x21x16xf32, #tpu.memory_space<vmem>>, %arg5: memref<18x64xf32, #tpu.memory_space<vmem>>) attributes {dimension_semantics = [#tpu.dimension_semantics<parallel>], iteration_bounds = array<i64: 2>, scalar_prefetch = 0 : i64, scratch_operands = 1 : i64, tpu.core_type = #tpu.core_type<tc>, window_params = [{transform_indices = @transform_0, window_bounds = array<i64: 1, 18, 8>}, {pipeline_mode = #tpu.pipeline_mode<synchronous>, transform_indices = @transform_1, window_bounds = array<i64: 4, 8, 64>}, {pipeline_mode = #tpu.pipeline_mode<synchronous>, transform_indices = @transform_2, window_bounds = array<i64: 1, 64>}, {transform_indices = @transform_3, window_bounds = array<i64: 1, 21, 16>}]} {
    %c0 = arith.constant 0 : index
    %c0_0 = arith.constant 0 : index
    %c0_1 = arith.constant 0 : index
    %0 = vector.load %arg1[%c0, %c0_0, %c0_1] : memref<1x18x8xf32, #tpu.memory_space<vmem>>, vector<1x18x8xf32>
    %1 = vector.shape_cast %0 : vector<1x18x8xf32> to vector<18x8xf32>
    %c0_2 = arith.constant 0 : index
    %c0_3 = arith.constant 0 : index
    %c0_4 = arith.constant 0 : index
    %2 = vector.load %arg2[%c0_2, %c0_3, %c0_4] : memref<4x8x64xf32, #tpu.memory_space<vmem>>, vector<1x8x64xf32>
    %3 = vector.shape_cast %2 : vector<1x8x64xf32> to vector<8x64xf32>
    %cst = arith.constant dense<0.000000e+00> : vector<18x64xf32>
    %4 = tpu.matmul %1, %3, %cst {dimension_numbers = #tpu.dot_dimension_numbers<[1], [0], [0], [1], [0, 0, 1, 1], [], []>} : vector<18x8xf32>, vector<8x64xf32>, vector<18x64xf32> -> vector<18x64xf32>
    %c0_5 = arith.constant 0 : index
    %c0_6 = arith.constant 0 : index
    %5 = vector.load %arg5[%c0_5, %c0_6] : memref<18x64xf32, #tpu.memory_space<vmem>>, vector<18x64xf32>
    tpu.vector_store %arg5[%c0_5, %c0_6], %4 {strides = array<i32>} : memref<18x64xf32, #tpu.memory_space<vmem>>, vector<18x64xf32>,
    %c0_7 = arith.constant 0 : index
    %c1 = arith.constant 1 : index
    %c0_8 = arith.constant 0 : index
    %6 = vector.load %arg1[%c0_7, %c1, %c0_8] : memref<1x18x8xf32, #tpu.memory_space<vmem>>, vector<1x17x8xf32>
    %7 = vector.shape_cast %6 : vector<1x17x8xf32> to vector<17x8xf32>
    %c1_9 = arith.constant 1 : index
    %c0_10 = arith.constant 0 : index
    %c0_11 = arith.constant 0 : index
    %8 = vector.load %arg2[%c1_9, %c0_10, %c0_11] : memref<4x8x64xf32, #tpu.memory_space<vmem>>, vector<1x8x64xf32>
    %9 = vector.shape_cast %8 : vector<1x8x64xf32> to vector<8x64xf32>
    %cst_12 = arith.constant dense<0.000000e+00> : vector<17x64xf32>
    %10 = tpu.matmul %7, %9, %cst_12 {dimension_numbers = #tpu.dot_dimension_numbers<[1], [0], [0], [1], [0, 0, 1, 1], [], []>} : vector<17x8xf32>, vector<8x64xf32>, vector<17x64xf32> -> vector<17x64xf32>
    %c0_13 = arith.constant 0 : index
    %c0_14 = arith.constant 0 : index
    %11 = vector.load %arg5[%c0_13, %c0_14] : memref<18x64xf32, #tpu.memory_space<vmem>>, vector<17x64xf32>
    %12 = arith.addf %11, %10 : vector<17x64xf32>
    %c0_15 = arith.constant 0 : index
    %c0_16 = arith.constant 0 : index
    %13 = vector.load %arg5[%c0_15, %c0_16] : memref<18x64xf32, #tpu.memory_space<vmem>>, vector<17x64xf32>
    tpu.vector_store %arg5[%c0_15, %c0_16], %12 {strides = array<i32>} : memref<18x64xf32, #tpu.memory_space<vmem>>, vector<17x64xf32>,
    %c0_17 = arith.constant 0 : index
    %c2 = arith.constant 2 : index
    %c0_18 = arith.constant 0 : index
    %14 = vector.load %arg1[%c0_17, %c2, %c0_18] : memref<1x18x8xf32, #tpu.memory_space<vmem>>, vector<1x16x8xf32>
    %15 = vector.shape_cast %14 : vector<1x16x8xf32> to vector<16x8xf32>
    %c2_19 = arith.constant 2 : index
    %c0_20 = arith.constant 0 : index
    %c0_21 = arith.constant 0 : index
    %16 = vector.load %arg2[%c2_19, %c0_20, %c0_21] : memref<4x8x64xf32, #tpu.memory_space<vmem>>, vector<1x8x64xf32>
    %17 = vector.shape_cast %16 : vector<1x8x64xf32> to vector<8x64xf32>
    %cst_22 = arith.constant dense<0.000000e+00> : vector<16x64xf32>
    %18 = tpu.matmul %15, %17, %cst_22 {dimension_numbers = #tpu.dot_dimension_numbers<[1], [0], [0], [1], [0, 0, 1, 1], [], []>} : vector<16x8xf32>, vector<8x64xf32>, vector<16x64xf32> -> vector<16x64xf32>
    %c0_23 = arith.constant 0 : index
    %c0_24 = arith.constant 0 : index
    %19 = vector.load %arg5[%c0_23, %c0_24] : memref<18x64xf32, #tpu.memory_space<vmem>>, vector<16x64xf32>
    %20 = arith.addf %19, %18 : vector<16x64xf32>
    %c0_25 = arith.constant 0 : index
    %c0_26 = arith.constant 0 : index
    %21 = vector.load %arg5[%c0_25, %c0_26] : memref<18x64xf32, #tpu.memory_space<vmem>>, vector<16x64xf32>
    tpu.vector_store %arg5[%c0_25, %c0_26], %20 {strides = array<i32>} : memref<18x64xf32, #tpu.memory_space<vmem>>, vector<16x64xf32>,
    %c0_27 = arith.constant 0 : index
    %c3 = arith.constant 3 : index
    %c0_28 = arith.constant 0 : index
    %22 = vector.load %arg1[%c0_27, %c3, %c0_28] : memref<1x18x8xf32, #tpu.memory_space<vmem>>, vector<1x15x8xf32>
    %23 = vector.shape_cast %22 : vector<1x15x8xf32> to vector<15x8xf32>
    %c3_29 = arith.constant 3 : index
    %c0_30 = arith.constant 0 : index
    %c0_31 = arith.constant 0 : index
    %24 = vector.load %arg2[%c3_29, %c0_30, %c0_31] : memref<4x8x64xf32, #tpu.memory_space<vmem>>, vector<1x8x64xf32>
    %25 = vector.shape_cast %24 : vector<1x8x64xf32> to vector<8x64xf32>
    %cst_32 = arith.constant dense<0.000000e+00> : vector<15x64xf32>
    %26 = tpu.matmul %23, %25, %cst_32 {dimension_numbers = #tpu.dot_dimension_numbers<[1], [0], [0], [1], [0, 0, 1, 1], [], []>} : vector<15x8xf32>, vector<8x64xf32>, vector<15x64xf32> -> vector<15x64xf32>
    %c0_33 = arith.constant 0 : index
    %c0_34 = arith.constant 0 : index
    %27 = vector.load %arg5[%c0_33, %c0_34] : memref<18x64xf32, #tpu.memory_space<vmem>>, vector<15x64xf32>
    %28 = arith.addf %27, %26 : vector<15x64xf32>
    %c0_35 = arith.constant 0 : index
    %c0_36 = arith.constant 0 : index
    %29 = vector.load %arg5[%c0_35, %c0_36] : memref<18x64xf32, #tpu.memory_space<vmem>>, vector<15x64xf32>
    tpu.vector_store %arg5[%c0_35, %c0_36], %28 {strides = array<i32>} : memref<18x64xf32, #tpu.memory_space<vmem>>, vector<15x64xf32>,
    %c0_37 = arith.constant 0 : index
    %c0_38 = arith.constant 0 : index
    %30 = vector.load %arg5[%c0_37, %c0_38] : memref<18x64xf32, #tpu.memory_space<vmem>>, vector<18x64xf32>
    %c0_39 = arith.constant 0 : index
    %c0_40 = arith.constant 0 : index
    %31 = vector.load %arg3[%c0_39, %c0_40] : memref<1x64xf32, #tpu.memory_space<vmem>>, vector<1x64xf32>
    %32 = vector.broadcast %31 : vector<1x64xf32> to vector<18x64xf32>
    %33 = arith.addf %30, %32 : vector<18x64xf32>
    %34 = arith.negf %33 : vector<18x64xf32>
    %35 = math.exp %34 : vector<18x64xf32>
    %cst_41 = arith.constant 1.000000e+00 : f32
    %36 = vector.broadcast %cst_41 : f32 to vector<18x64xf32>
    %37 = arith.addf %36, %35 : vector<18x64xf32>
    %38 = arith.divf %36, %37 : vector<18x64xf32>
    %39 = arith.mulf %33, %38 : vector<18x64xf32>
    %c0_42 = arith.constant 0 : index
    %c0_43 = arith.constant 0 : index
    %40 = vector.load %arg5[%c0_42, %c0_43] : memref<18x64xf32, #tpu.memory_space<vmem>>, vector<18x64xf32>
    tpu.vector_store %arg5[%c0_42, %c0_43], %39 {strides = array<i32>} : memref<18x64xf32, #tpu.memory_space<vmem>>, vector<18x64xf32>,
    %c0_44 = arith.constant 0 : index
    %c0_45 = arith.constant 0 : index
    %41 = tpu.strided_load %arg5[%c0_44, %c0_45] {strides = array<i32: 3, 1>} : memref<18x64xf32, #tpu.memory_space<vmem>>, vector<6x64xf32>
    %c1_46 = arith.constant 1 : index
    %c0_47 = arith.constant 0 : index
    %42 = tpu.strided_load %arg5[%c1_46, %c0_47] {strides = array<i32: 3, 1>} : memref<18x64xf32, #tpu.memory_space<vmem>>, vector<6x64xf32>
    %c2_48 = arith.constant 2 : index
    %c0_49 = arith.constant 0 : index
    %43 = tpu.strided_load %arg5[%c2_48, %c0_49] {strides = array<i32: 3, 1>} : memref<18x64xf32, #tpu.memory_space<vmem>>, vector<6x64xf32>
    %44 = arith.maximumf %41, %42 : vector<6x64xf32>
    %45 = arith.maximumf %44, %43 : vector<6x64xf32>
    %46 = vector.extract_strided_slice %45 {offsets = [0, 0], sizes = [6, 16], strides = [1, 1]} : vector<6x64xf32> to vector<6x16xf32>
    %c0_50 = arith.constant 0 : index
    %c0_51 = arith.constant 0 : index
    %c0_52 = arith.constant 0 : index
    %47 = vector.load %arg4[%c0_50, %c0_51, %c0_52] : memref<1x21x16xf32, #tpu.memory_space<vmem>>, vector<1x6x16xf32>
    %48 = vector.shape_cast %47 : vector<1x6x16xf32> to vector<6x16xf32>
    %49 = vector.shape_cast %46 : vector<6x16xf32> to vector<1x6x16xf32>
    tpu.vector_store %arg4[%c0_50, %c0_51, %c0_52], %49 {strides = array<i32>} : memref<1x21x16xf32, #tpu.memory_space<vmem>>, vector<1x6x16xf32>,
    %50 = vector.extract_strided_slice %45 {offsets = [0, 16], sizes = [5, 16], strides = [1, 1]} : vector<6x64xf32> to vector<5x16xf32>
    %c0_53 = arith.constant 0 : index
    %c6 = arith.constant 6 : index
    %c0_54 = arith.constant 0 : index
    %51 = vector.load %arg4[%c0_53, %c6, %c0_54] : memref<1x21x16xf32, #tpu.memory_space<vmem>>, vector<1x5x16xf32>
    %52 = vector.shape_cast %51 : vector<1x5x16xf32> to vector<5x16xf32>
    %53 = vector.shape_cast %50 : vector<5x16xf32> to vector<1x5x16xf32>
    tpu.vector_store %arg4[%c0_53, %c6, %c0_54], %53 {strides = array<i32>} : memref<1x21x16xf32, #tpu.memory_space<vmem>>, vector<1x5x16xf32>,
    %54 = vector.extract_strided_slice %45 {offsets = [0, 32], sizes = [5, 16], strides = [1, 1]} : vector<6x64xf32> to vector<5x16xf32>
    %c0_55 = arith.constant 0 : index
    %c11 = arith.constant 11 : index
    %c0_56 = arith.constant 0 : index
    %55 = vector.load %arg4[%c0_55, %c11, %c0_56] : memref<1x21x16xf32, #tpu.memory_space<vmem>>, vector<1x5x16xf32>
    %56 = vector.shape_cast %55 : vector<1x5x16xf32> to vector<5x16xf32>
    %57 = vector.shape_cast %54 : vector<5x16xf32> to vector<1x5x16xf32>
    tpu.vector_store %arg4[%c0_55, %c11, %c0_56], %57 {strides = array<i32>} : memref<1x21x16xf32, #tpu.memory_space<vmem>>, vector<1x5x16xf32>,
    %58 = vector.extract_strided_slice %45 {offsets = [0, 48], sizes = [5, 16], strides = [1, 1]} : vector<6x64xf32> to vector<5x16xf32>
    %c0_57 = arith.constant 0 : index
    %c16 = arith.constant 16 : index
    %c0_58 = arith.constant 0 : index
    %59 = vector.load %arg4[%c0_57, %c16, %c0_58] : memref<1x21x16xf32, #tpu.memory_space<vmem>>, vector<1x5x16xf32>
    %60 = vector.shape_cast %59 : vector<1x5x16xf32> to vector<5x16xf32>
    %61 = vector.shape_cast %58 : vector<5x16xf32> to vector<1x5x16xf32>
    tpu.vector_store %arg4[%c0_57, %c16, %c0_58], %61 {strides = array<i32>} : memref<1x21x16xf32, #tpu.memory_space<vmem>>, vector<1x5x16xf32>,
    return
  }
  func.func @transform_0(%arg0: i32) -> (i32, i32, i32) {
    %c0_i32 = arith.constant 0 : i32
    %c0_i32_0 = arith.constant 0 : i32
    %c0_i32_1 = arith.constant 0 : i32
    return %arg0, %c0_i32, %c0_i32_0 : i32, i32, i32
  }
  func.func @transform_1(%arg0: i32) -> (i32, i32, i32) {
    %c0_i32 = arith.constant 0 : i32
    %c0_i32_0 = arith.constant 0 : i32
    %c0_i32_1 = arith.constant 0 : i32
    %c0_i32_2 = arith.constant 0 : i32
    return %c0_i32, %c0_i32_0, %c0_i32_1 : i32, i32, i32
  }
  func.func @transform_2(%arg0: i32) -> (i32, i32) {
    %c0_i32 = arith.constant 0 : i32
    %c0_i32_0 = arith.constant 0 : i32
    %c0_i32_1 = arith.constant 0 : i32
    return %c0_i32, %c0_i32_0 : i32, i32
  }
  func.func @transform_3(%arg0: i32) -> (i32, i32, i32) {
    %c0_i32 = arith.constant 0 : i32
    %c0_i32_0 = arith.constant 0 : i32
    %c0_i32_1 = arith.constant 0 : i32
    return %arg0, %c0_i32, %c0_i32_0 : i32, i32, i32
  }
}

</mosaic_0001>

<llo_original>
// kernel: tpu_custom_call.1
$region0: #{tpu_custom_call.1}
  #allocation0 [shape = 'u32[]', space=smem, size = 0x4, offset = 0x4, fixed_abs, tag = 'smem constant byte address 0x4 - core index']
  #allocation1 [shape = 'u32[72,128]{1,0:T(1,128)}', space=vmem, size = 0x9000, scoped, tag = 'internal scratch']
  #allocation2 [shape = 'f32[18,64]{1,0:T(8,128)}', space=vmem, size = 0x3000, scoped, tag = 'scratch operand']
  %s0 = inlined_call_operand.vmem [shape: f32[2,18,8], index: 0, kind: input, shape index: {}]
  %s1 = inlined_call_operand.vmem [shape: f32[4,8,64], index: 1, kind: input, shape index: {}]
  %s2 = inlined_call_operand.vmem [shape: f32[1,64], index: 2, kind: input, shape index: {}]
  %s3 = inlined_call_operand.vmem [shape: f32[2,21,16], index: 3, kind: output, shape index: {}]
  %s4 = sld [smem:[#allocation0]]
  $region45: #{tpu_custom_call.1} parent=0
    _
  %s6 = ssub.s32 1, %s4
  %s7 = scalar_select 0, %s6, %s4
  loop: start=0, step=1, limit=4
  $region2: #{tpu_custom_call.1} parent=0 // loop_pre_header
    _
  $region3: #{tpu_custom_call.1} parent=0 // loop_header
    %s9 = sphi 0, %s13
    %p10 = scmp.ge.s32.totalorder %s9, 4
    %s19 = sphi 0, %s21
    %s22 = sphi 0, %s19
    %s23 = sphi 0, %s22
    %s39 = sphi 0, %s23
    %s43 = sphi 0, %s43
    %s45 = sphi 0, %s43
    %s46 = sphi 0, %s45
    %s60 = sphi 0, %s46
    %s64 = sphi 0, %s64
    %s66 = sphi 0, %s64
    %s67 = sphi 0, %s66
    %s81 = sphi 0, %s67
    %s87 = sphi 0, %s89
    %s90 = sphi 0, %s87
    %s91 = sphi 0, %s90
    %s107 = sphi 0, %s91
  $region4: #{tpu_custom_call.1} parent=0 // loop_header_branch
    %12 = sbr.rel (%p10) target = $region8
  $region5: #{tpu_custom_call.1} parent=0 // loop_body
    %s14 = ssub.s32 %s9, 1
    %s15 = ssub.s32 %s9, 2
    %s16 = sadd.s32 %s9, 1
    %s17 = ssub.s32 %s9, %s16
    %p18 = scmp.eq.s32.totalorder %s17, 0
    %s20 = sadd.s32 %s19, 1
    %s21 = scalar_select %p18, %s19, %s20
    %p24 = pneg %p18
    %p25 = scmp.eq.s32.totalorder %s9, 1
    %p26 = por %p24, %p25
    %p27 = scmp.ne.s32.totalorder %s19, %s22
    %p28 = scmp.eq.s32.totalorder %s9, 0
    %p29 = por %p27, %p28
    %p30 = scmp.ne.s32.totalorder %s19, %s22
    %p31 = scmp.eq.s32.totalorder %s14, 1
    %p32 = por %p30, %p31
    %p33 = scmp.ne.s32.totalorder %s22, %s23
    %p34 = scmp.eq.s32.totalorder %s14, 0
    %p35 = por %p33, %p34
    %p36 = scmp.ne.s32.totalorder %s22, %s23
    %p37 = scmp.eq.s32.totalorder %s15, 1
    %p38 = por %p36, %p37
    %p40 = scmp.ne.s32.totalorder %s23, %s39
    %p41 = scmp.eq.s32.totalorder %s15, 0
    %p42 = por %p40, %p41
    %s44 = sadd.s32 %s43, 1
    %p47 = scmp.eq.s32.totalorder %s9, 1
    %p48 = scmp.ne.s32.totalorder %s43, %s45
    %p49 = scmp.eq.s32.totalorder %s9, 0
    %p50 = por %p48, %p49
    %p51 = scmp.ne.s32.totalorder %s43, %s45
    %p52 = scmp.eq.s32.totalorder %s14, 1
    %p53 = por %p51, %p52
    %p54 = scmp.ne.s32.totalorder %s45, %s46
    %p55 = scmp.eq.s32.totalorder %s14, 0
    %p56 = por %p54, %p55
    %p57 = scmp.ne.s32.totalorder %s45, %s46
    %p58 = scmp.eq.s32.totalorder %s15, 1
    %p59 = por %p57, %p58
    %p61 = scmp.ne.s32.totalorder %s46, %s60
    %p62 = scmp.eq.s32.totalorder %s15, 0
    %p63 = por %p61, %p62
    %s65 = sadd.s32 %s64, 1
    %p68 = scmp.eq.s32.totalorder %s9, 1
    %p69 = scmp.ne.s32.totalorder %s64, %s66
    %p70 = scmp.eq.s32.totalorder %s9, 0
    %p71 = por %p69, %p70
    %p72 = scmp.ne.s32.totalorder %s64, %s66
    %p73 = scmp.eq.s32.totalorder %s14, 1
    %p74 = por %p72, %p73
    %p75 = scmp.ne.s32.totalorder %s66, %s67
    %p76 = scmp.eq.s32.totalorder %s14, 0
    %p77 = por %p75, %p76
    %p78 = scmp.ne.s32.totalorder %s66, %s67
    %p79 = scmp.eq.s32.totalorder %s15, 1
    %p80 = por %p78, %p79
    %p82 = scmp.ne.s32.totalorder %s67, %s81
    %p83 = scmp.eq.s32.totalorder %s15, 0
    %p84 = por %p82, %p83
    %s85 = ssub.s32 %s9, %s16
    %p86 = scmp.eq.s32.totalorder %s85, 0
    %s88 = sadd.s32 %s87, 1
    %s89 = scalar_select %p86, %s87, %s88
    %p92 = pneg %p86
    %p93 = scmp.eq.s32.totalorder %s9, 1
    %p94 = por %p92, %p93
    %p95 = scmp.ne.s32.totalorder %s87, %s90
    %p96 = scmp.eq.s32.totalorder %s9, 0
    %p97 = por %p95, %p96
    %p98 = scmp.ne.s32.totalorder %s87, %s90
    %p99 = scmp.eq.s32.totalorder %s14, 1
    %p100 = por %p98, %p99
    %p101 = scmp.ne.s32.totalorder %s90, %s91
    %p102 = scmp.eq.s32.totalorder %s14, 0
    %p103 = por %p101, %p102
    %p104 = scmp.ne.s32.totalorder %s90, %s91
    %p105 = scmp.eq.s32.totalorder %s15, 1
    %p106 = por %p104, %p105
    %p108 = scmp.ne.s32.totalorder %s91, %s107
    %p109 = scmp.eq.s32.totalorder %s15, 0
    %p110 = por %p108, %p109
    %p111 = scmp.le.s32.totalorder 1, %s9
    %p112 = scmp.lt.s32.totalorder %s9, 3
    %p113 = pnand %p111, %p112
    %p114 = pneg %p113
    // Predicated region
    $region9: #{tpu_custom_call.1} parent=5 // pred_check
      _
    $region10: #{tpu_custom_call.1} parent=5 // pred_check_branch
      %116 = sbr.rel (%p113) target = $region12
    $region11: #{tpu_custom_call.1} parent=5 // pred_region
      %s117 = ssub.s32 %s9, 1
      // Predicated region
      $region13: #{tpu_custom_call.1} parent=11 // pred_check
        %p118 = pneg %p56
      $region14: #{tpu_custom_call.1} parent=11 // pred_check_branch
        %120 = sbr.rel (%p118) target = $region16
      $region15: #{tpu_custom_call.1} parent=11 // pred_region
        _
      $region16: #{tpu_custom_call.1} parent=11 // pred_fallthru
        _
      // Predicated region
      $region17: #{tpu_custom_call.1} parent=11 // pred_check
        %p121 = pneg %p77
      $region18: #{tpu_custom_call.1} parent=11 // pred_check_branch
        %123 = sbr.rel (%p121) target = $region20
      $region19: #{tpu_custom_call.1} parent=11 // pred_region
        _
      $region20: #{tpu_custom_call.1} parent=11 // pred_fallthru
        _
    $region12: #{tpu_custom_call.1} parent=5 // pred_fallthru
      _
    %p124 = scmp.lt.s32.totalorder %s9, 2
    // Predicated region
    $region21: #{tpu_custom_call.1} parent=5 // pred_check
      %p125 = pneg %p124
    $region22: #{tpu_custom_call.1} parent=5 // pred_check_branch
      %127 = sbr.rel (%p125) target = $region24
    $region23: #{tpu_custom_call.1} parent=5 // pred_region
      // Predicated region
      $region25: #{tpu_custom_call.1} parent=23 // pred_check
        %p128 = pneg %p29
      $region26: #{tpu_custom_call.1} parent=23 // pred_check_branch
        %130 = sbr.rel (%p128) target = $region28
      $region27: #{tpu_custom_call.1} parent=23 // pred_region
        %p131 = scmp.lt.s32.totalorder %s9, 1
        %s132 = scalar_select %p131, %s9, 1
        %s133 = smul.addr %s132, 3
        %s134 = smul.addr %s133, 8
        %s135 = scalar_lea.vmem %s0, %s134
      $region28: #{tpu_custom_call.1} parent=23 // pred_fallthru
        _
    $region24: #{tpu_custom_call.1} parent=5 // pred_fallthru
      _
    %p136 = scmp.le.s32.totalorder 1, %s9
    %p137 = scmp.lt.s32.totalorder %s9, 3
    %p138 = pnand %p136, %p137
    %p139 = pneg %p138
    // Predicated region
    $region29: #{tpu_custom_call.1} parent=5 // pred_check
      _
    $region30: #{tpu_custom_call.1} parent=5 // pred_check_branch
      %141 = sbr.rel (%p138) target = $region32
    $region31: #{tpu_custom_call.1} parent=5 // pred_region
      %s142 = ssub.s32 %s9, 1
      %p143 = scmp.lt.s32.totalorder %s14, 1
      %s144 = scalar_select %p143, %s14, 1
      %s145 = smul.addr %s144, 3
      %s146 = smul.addr %s145, 8
      %s147 = scalar_lea.vmem %s0, %s146
      %p148 = pneg %p35
      %p149 = pneg %p32
      %p150 = pneg %p56
      %p151 = pneg %p53
      %p152 = pneg %p77
      %p153 = pneg %p74
      %p154 = pneg %p103
      %p155 = pneg %p100
      %p156 = scmp.lt.s32.totalorder %s14, 1
      %s157 = scalar_select %p156, %s14, 1
      %s158 = smul.addr %s157, 3
      %s159 = smul.addr %s158, 8
      %s160 = scalar_lea.vmem %s3, %s159
      %p161 = scmp.lt.s32.totalorder %s14, 1
      %s162 = scalar_select %p161, %s14, 1
      %s163 = smul.addr %s162, 3
      %s164 = smul.addr %s163, 8
      %s165 = scalar_lea.vmem %s0, %s164
      %p166 = scmp.lt.s32.totalorder %s14, 1
      %s167 = scalar_select %p166, %s14, 1
      %s168 = smul.addr %s167, 3
      %s169 = smul.addr %s168, 8
      %s170 = scalar_lea.vmem %s3, %s169
      %v171 = vld [vmem:[%s165] sm:$0xff]
      %v172 = vld [vmem:[%s165 + $0x8] sm:$0xff]
      %v173 = vld [vmem:[%s165 + $0x10] sm:$0x3]
      %v174 = vld [vmem:[%s1] sm:$0xff]
      %vm175 = vcmask 64512
      %v177 = vsel %vm175, %v171, 0
      %v180 = vsel %vm175, %v172, 0
      %v183 = vsel %vm175, %v173, 0
      %185 = vmatpush.msra.mxu0 0.0
      %186 = vmatpush.msra.mxu0 0.0
      %187 = vmatpush.msra.mxu0 0.0
      %188 = vmatpush.msra.mxu0 0.0
      %189 = vmatpush.msra.mxu0 0.0
      %190 = vmatpush.msra.mxu0 0.0
      %191 = vmatpush.msra.mxu0 0.0
      %192 = vmatpush.msra.mxu0 0.0
      %193 = vmatpush.msra.mxu0 0.0
      %194 = vmatpush.msra.mxu0 0.0
      %195 = vmatpush.msra.mxu0 0.0
      %196 = vmatpush.msra.mxu0 0.0
      %197 = vmatpush.msra.mxu0 0.0
      %198 = vmatpush.msra.mxu0 0.0
      %199 = vmatpush.msra.mxu0 0.0
      %200 = vmatpush.msra.mxu0 %v174
      %201 = vmatmul.f32.gmra.mxu0 %v177
      %v202 = vpop.f32.mrf.mxu0
      %v203 = vadd.f32 0.0, %v202
      %204 = vmatmul.f32.gmra.mxu0 %v180
      %v205 = vpop.f32.mrf.mxu0
      %v206 = vadd.f32 0.0, %v205
      %207 = vmatmul.f32.gmra.mxu0 %v183
      %v208 = vpop.f32.mrf.mxu0
      %v209 = vadd.f32 0.0, %v208
      %210 = vdwg.mxu0
      %vm211 = vcmask 523264
      %212 = vst.msk [vmem:[#allocation2] sm:$0xff] %vm211, %v203
      %213 = vst.msk [vmem:[#allocation2 + $0x8] sm:$0xff] %vm211, %v206
      %vm214 = vcmask 517120
      %215 = vst.msk [vmem:[#allocation2 + $0x10] sm:$0x3] %vm214, %v209
      %v216 = vld [vmem:[%s165 + $0x1] sm:$0xff]
      %v217 = vld [vmem:[%s165 + $0x9] sm:$0xff]
      %v218 = vld [vmem:[%s165 + $0x11] sm:$0x1]
      %s219 = scalar_lea.vmem %s1, 8
      %v220 = vld [vmem:[%s219] sm:$0xff]
      %v222 = vsel %vm175, %v216, 0
      %v225 = vsel %vm175, %v217, 0
      %v228 = vsel %vm175, %v218, 0
      %230 = vmatpush.msra.mxu0 0.0
      %231 = vmatpush.msra.mxu0 0.0
      %232 = vmatpush.msra.mxu0 0.0
      %233 = vmatpush.msra.mxu0 0.0
      %234 = vmatpush.msra.mxu0 0.0
      %235 = vmatpush.msra.mxu0 0.0
      %236 = vmatpush.msra.mxu0 0.0
      %237 = vmatpush.msra.mxu0 0.0
      %238 = vmatpush.msra.mxu0 0.0
      %239 = vmatpush.msra.mxu0 0.0
      %240 = vmatpush.msra.mxu0 0.0
      %241 = vmatpush.msra.mxu0 0.0
      %242 = vmatpush.msra.mxu0 0.0
      %243 = vmatpush.msra.mxu0 0.0
      %244 = vmatpush.msra.mxu0 0.0
      %245 = vmatpush.msra.mxu0 %v220
      %246 = vmatmul.f32.gmra.mxu0 %v222
      %v247 = vpop.f32.mrf.mxu0
      %v248 = vadd.f32 0.0, %v247
      %249 = vmatmul.f32.gmra.mxu0 %v225
      %v250 = vpop.f32.mrf.mxu0
      %v251 = vadd.f32 0.0, %v250
      %252 = vmatmul.f32.gmra.mxu0 %v228
      %v253 = vpop.f32.mrf.mxu0
      %v254 = vadd.f32 0.0, %v253
      %255 = vdwg.mxu0
      %v256 = vld [vmem:[#allocation2] sm:$0xff]
      %v257 = vld [vmem:[#allocation2 + $0x8] sm:$0xff]
      %v258 = vld [vmem:[#allocation2 + $0x10] sm:$0x1]
      %v259 = vadd.f32 %v256, %v248
      %v260 = vadd.f32 %v257, %v251
      %v261 = vadd.f32 %v258, %v254
      %262 = vst.msk [vmem:[#allocation2] sm:$0xff] %vm211, %v259
      %263 = vst.msk [vmem:[#allocation2 + $0x8] sm:$0xff] %vm211, %v260
      %vm264 = vcmask 516096
      %265 = vst.msk [vmem:[#allocation2 + $0x10] sm:$0x1] %vm264, %v261
      %v266 = vld [vmem:[%s165 + $0x2] sm:$0xff]
      %v267 = vld [vmem:[%s165 + $0xa] sm:$0xff]
      %s268 = scalar_lea.vmem %s1, 16
      %v269 = vld [vmem:[%s268] sm:$0xff]
      %v271 = vsel %vm175, %v266, 0
      %v274 = vsel %vm175, %v267, 0
      %276 = vmatpush.msra.mxu0 0.0
      %277 = vmatpush.msra.mxu0 0.0
      %278 = vmatpush.msra.mxu0 0.0
      %279 = vmatpush.msra.mxu0 0.0
      %280 = vmatpush.msra.mxu0 0.0
      %281 = vmatpush.msra.mxu0 0.0
      %282 = vmatpush.msra.mxu0 0.0
      %283 = vmatpush.msra.mxu0 0.0
      %284 = vmatpush.msra.mxu0 0.0
      %285 = vmatpush.msra.mxu0 0.0
      %286 = vmatpush.msra.mxu0 0.0
      %287 = vmatpush.msra.mxu0 0.0
      %288 = vmatpush.msra.mxu0 0.0
      %289 = vmatpush.msra.mxu0 0.0
      %290 = vmatpush.msra.mxu0 0.0
      %291 = vmatpush.msra.mxu0 %v269
      %292 = vmatmul.f32.gmra.mxu0 %v271
      %v293 = vpop.f32.mrf.mxu0
      %v294 = vadd.f32 0.0, %v293
      %295 = vmatmul.f32.gmra.mxu0 %v274
      %v296 = vpop.f32.mrf.mxu0
      %v297 = vadd.f32 0.0, %v296
      %298 = vdwg.mxu0
      %v299 = vld [vmem:[#allocation2] sm:$0xff]
      %v300 = vld [vmem:[#allocation2 + $0x8] sm:$0xff]
      %v301 = vadd.f32 %v299, %v294
      %v302 = vadd.f32 %v300, %v297
      %303 = vst.msk [vmem:[#allocation2] sm:$0xff] %vm211, %v301
      %304 = vst.msk [vmem:[#allocation2 + $0x8] sm:$0xff] %vm211, %v302
      %v305 = vld [vmem:[%s165 + $0x3] sm:$0xff]
      %v306 = vld [vmem:[%s165 + $0xb] sm:$0x7f]
      %s307 = scalar_lea.vmem %s1, 24
      %v308 = vld [vmem:[%s307] sm:$0xff]
      %v310 = vsel %vm175, %v305, 0
      %v313 = vsel %vm175, %v306, 0
      %315 = vmatpush.msra.mxu0 0.0
      %316 = vmatpush.msra.mxu0 0.0
      %317 = vmatpush.msra.mxu0 0.0
      %318 = vmatpush.msra.mxu0 0.0
      %319 = vmatpush.msra.mxu0 0.0
      %320 = vmatpush.msra.mxu0 0.0
      %321 = vmatpush.msra.mxu0 0.0
      %322 = vmatpush.msra.mxu0 0.0
      %323 = vmatpush.msra.mxu0 0.0
      %324 = vmatpush.msra.mxu0 0.0
      %325 = vmatpush.msra.mxu0 0.0
      %326 = vmatpush.msra.mxu0 0.0
      %327 = vmatpush.msra.mxu0 0.0
      %328 = vmatpush.msra.mxu0 0.0
      %329 = vmatpush.msra.mxu0 0.0
      %330 = vmatpush.msra.mxu0 %v308
      %331 = vmatmul.f32.gmra.mxu0 %v310
      %v332 = vpop.f32.mrf.mxu0
      %v333 = vadd.f32 0.0, %v332
      %334 = vmatmul.f32.gmra.mxu0 %v313
      %v335 = vpop.f32.mrf.mxu0
      %v336 = vadd.f32 0.0, %v335
      %337 = vdwg.mxu0
      %v338 = vld [vmem:[#allocation2] sm:$0xff]
      %v339 = vld [vmem:[#allocation2 + $0x8] sm:$0x7f]
      %v340 = vadd.f32 %v338, %v333
      %v341 = vadd.f32 %v339, %v336
      %342 = vst.msk [vmem:[#allocation2] sm:$0xff] %vm211, %v340
      %vm343 = vcmask 522240
      %344 = vst.msk [vmem:[#allocation2 + $0x8] sm:$0x7f] %vm343, %v341
      %v345 = vld [vmem:[#allocation2] sm:$0xff]
      %v346 = vld [vmem:[#allocation2 + $0x8] sm:$0xff]
      %v347 = vld [vmem:[#allocation2 + $0x10] sm:$0x3]
      %v348 = vld [vmem:[%s2] sm:$0x1]
      %v350 = vperm.slane %v348, 0
      %v352 = vadd.f32 %v345, %v350
      %v353 = vadd.f32 %v346, %v350
      %v354 = vadd.f32 %v347, %v350
      %v355 = vxor.u32 %v352, 2147483648
      %v356 = vxor.u32 %v353, 2147483648
      %v357 = vxor.u32 %v354, 2147483648
      %v358 = vmul.f32 %v355, 1.442695
      %v359 = vpow.pop %v358
      %v360 = vmul.f32 %v356, 1.442695
      %v361 = vpow.pop %v360
      %v362 = vmul.f32 %v357, 1.442695
      %v363 = vpow.pop %v362
      %v364 = vadd.f32 %v359, 1.0
      %v365 = vadd.f32 %v361, 1.0
      %v366 = vadd.f32 %v363, 1.0
      %v367 = vrcp.pop %v364
      %v368 = vmul.f32 %v364, %v367
      %v369 = vsub.f32 1.0, %v368
      %v370 = vmul.f32 %v367, %v369
      %v371 = vadd.f32 %v367, %v370
      %vm372 = vweird.f32 %v364
      %vm373 = vweird.f32 %v367
      %vm374 = vmor %vm372, %vm373
      %v375 = vsel %vm374, %v367, %v371
      %v376 = vand.u32 2147483647, %v364
      %vm377 = vcmp.eq.f32.partialorder %v376, 8.507059e+37
      %v378 = vand.u32 %v364, 2147483648
      %v379 = vor.u32 1.1754944e-38, %v378
      %v380 = vsel %vm377, %v379, %v375
      %v381 = vmul.f32 1.0, %v380
      %v382 = vrcp.pop %v365
      %v383 = vmul.f32 %v365, %v382
      %v384 = vsub.f32 1.0, %v383
      %v385 = vmul.f32 %v382, %v384
      %v386 = vadd.f32 %v382, %v385
      %vm387 = vweird.f32 %v365
      %vm388 = vweird.f32 %v382
      %vm389 = vmor %vm387, %vm388
      %v390 = vsel %vm389, %v382, %v386
      %v391 = vand.u32 2147483647, %v365
      %vm392 = vcmp.eq.f32.partialorder %v391, 8.507059e+37
      %v393 = vand.u32 %v365, 2147483648
      %v394 = vor.u32 1.1754944e-38, %v393
      %v395 = vsel %vm392, %v394, %v390
      %v396 = vmul.f32 1.0, %v395
      %v397 = vrcp.pop %v366
      %v398 = vmul.f32 %v366, %v397
      %v399 = vsub.f32 1.0, %v398
      %v400 = vmul.f32 %v397, %v399
      %v401 = vadd.f32 %v397, %v400
      %vm402 = vweird.f32 %v366
      %vm403 = vweird.f32 %v397
      %vm404 = vmor %vm402, %vm403
      %v405 = vsel %vm404, %v397, %v401
      %v406 = vand.u32 2147483647, %v366
      %vm407 = vcmp.eq.f32.partialorder %v406, 8.507059e+37
      %v408 = vand.u32 %v366, 2147483648
      %v409 = vor.u32 1.1754944e-38, %v408
      %v410 = vsel %vm407, %v409, %v405
      %v411 = vmul.f32 1.0, %v410
      %v412 = vmul.f32 %v352, %v381
      %v413 = vmul.f32 %v353, %v396
      %v414 = vmul.f32 %v354, %v411
      %415 = vst.msk [vmem:[#allocation2] sm:$0xff] %vm211, %v412
      %416 = vst.msk [vmem:[#allocation2 + $0x8] sm:$0xff] %vm211, %v413
      %417 = vst.msk [vmem:[#allocation2 + $0x10] sm:$0x3] %vm214, %v414
      %v418 = vld [vmem:[#allocation2] ss:$3 sm:$0x3f]
      %s419 = scalar_lea.vmem [#allocation2], 1
      %v420 = vld [vmem:[%s419] ss:$3 sm:$0x3f]
      %s421 = scalar_lea.vmem [#allocation2], 2
      %v422 = vld [vmem:[%s421] ss:$3 sm:$0x3f]
      %v423 = vmax.f32 %v418, %v420
      %v424 = vmax.f32 %v423, %v422
      %vm425 = vcmask 128000
      %426 = vst.msk [vmem:[%s170] sm:$0x3f] %vm425, %v424
      %428 = vrot.lane.b32.xlu0 %v424, 112
      %v429 = vpop.permute.xlu0 %428
      %vm431 = vcmask 126976
      %432 = vst.msk [vmem:[%s170 + $0x6] sm:$0x1f] %vm431, %v429
      %433 = vrot.lane.b32.xlu0 %v424, 96
      %v434 = vpop.permute.xlu0 %433
      %436 = vst.msk [vmem:[%s170 + $0xb] sm:$0x1f] %vm431, %v434
      %437 = vrot.lane.b32.xlu0 %v424, 80
      %v438 = vpop.permute.xlu0 %437
      %440 = vst.msk [vmem:[%s170 + $0x10] sm:$0x1f] %vm431, %v438
      %p441 = scmp.lt.s32.totalorder %s14, 1
      %s442 = scalar_select %p441, %s14, 1
      %s443 = smul.addr %s442, 3
      %s444 = smul.addr %s443, 8
      %s445 = scalar_lea.vmem %s3, %s444
      // Predicated region
      $region33: #{tpu_custom_call.1} parent=31 // pred_check
        %p446 = pneg %p100
      $region34: #{tpu_custom_call.1} parent=31 // pred_check_branch
        %448 = sbr.rel (%p446) target = $region36
      $region35: #{tpu_custom_call.1} parent=31 // pred_region
        _
      $region36: #{tpu_custom_call.1} parent=31 // pred_fallthru
        _
    $region32: #{tpu_custom_call.1} parent=5 // pred_fallthru
      _
    %p449 = scmp.le.s32.totalorder 2, %s9
    // Predicated region
    $region37: #{tpu_custom_call.1} parent=5 // pred_check
      %p450 = pneg %p449
    $region38: #{tpu_custom_call.1} parent=5 // pred_check_branch
      %452 = sbr.rel (%p450) target = $region40
    $region39: #{tpu_custom_call.1} parent=5 // pred_region
      %s453 = ssub.s32 %s9, 2
      // Predicated region
      $region41: #{tpu_custom_call.1} parent=39 // pred_check
        %p454 = pneg %p106
      $region42: #{tpu_custom_call.1} parent=39 // pred_check_branch
        %456 = sbr.rel (%p454) target = $region44
      $region43: #{tpu_custom_call.1} parent=39 // pred_region
        %p457 = scmp.lt.s32.totalorder %s15, 1
        %s458 = scalar_select %p457, %s15, 1
        %s459 = smul.addr %s458, 3
        %s460 = smul.addr %s459, 8
        %s461 = scalar_lea.vmem %s3, %s460
      $region44: #{tpu_custom_call.1} parent=39 // pred_fallthru
        _
    $region40: #{tpu_custom_call.1} parent=5 // pred_fallthru
      _
  $region6: #{tpu_custom_call.1} parent=0 // loop_footer
    %s13 = sadd.s32 1, %s9
  $region7: #{tpu_custom_call.1} parent=0 // loop_footer_branch
    %8 = sbr.rel target = $region3
  $region8: #{tpu_custom_call.1} parent=0 // loop_exit
    _

</llo_original>
